<compile_context>
chip_gen: v5e
topology: v5e:2x2
jax: 0.10.0
libtpu: 0.0.40
codegen_flags: <defaults>
</compile_context>

<pallas_src>
import functools
import math

import jax
import jax.numpy as jnp
from jax.experimental import pallas as pl
from jax.experimental.pallas import tpu as pltpu


def make_sinusoidal_table(maxlen: int, emb_size: int, dtype=jnp.float32) -> jax.Array:
    """Precompute the module's register_buffer: (maxlen, emb_size) sin/cos table."""
    den = jnp.exp(
        -jnp.arange(0, emb_size, 2, dtype=jnp.float32) * (math.log(10000.0) / emb_size)
    )
    pos = jnp.arange(0, maxlen, dtype=jnp.float32)[:, None]           # (maxlen, 1)
    ang = pos * den[None, :]                                           # (maxlen, emb/2)
    pe = jnp.zeros((maxlen, emb_size), jnp.float32)
    pe = pe.at[:, 0::2].set(jnp.sin(ang))
    pe = pe.at[:, 1::2].set(jnp.cos(ang))
    return pe.astype(dtype)


def _as_i32(c: int) -> int:
    """Python int -> value representable as int32 (two's complement wrap)."""
    c &= 0xFFFFFFFF
    return c - (1 << 32) if c >= (1 << 31) else c


def _lsr32(x, k: int):
    """Logical right shift of an int32 array (arithmetic shift + mask)."""
    return (x >> k) & jnp.int32((1 << (32 - k)) - 1)


def _fmix32(h):
    """murmur3 32-bit finalizer: bijective avalanche mixer, int32 ops only."""
    h = h ^ _lsr32(h, 16)
    h = h * jnp.int32(_as_i32(0x85EBCA6B))
    h = h ^ _lsr32(h, 13)
    h = h * jnp.int32(_as_i32(0xC2B2AE35))
    h = h ^ _lsr32(h, 16)
    return h


def _pos_encoding_kernel(x_ref, pos_ref, out_ref, *, batch, emb, p, train, seed):
    # x_ref/out_ref: (ts, batch*emb) block; pos_ref: (ts, emb) block.
    ts = x_ref.shape[0]
    pe = pos_ref[...].astype(jnp.float32)            # reused for every batch slice

    apply_dropout = train and p > 0.0
    if apply_dropout:
        # Global element index (seq_row * batch*emb + flat_col) -> hash -> keep.
        row0 = pl.program_id(0) * ts
        rows = jax.lax.broadcasted_iota(jnp.int32, (ts, emb), 0) + row0
        cols = jax.lax.broadcasted_iota(jnp.int32, (ts, emb), 1)
        base = rows * jnp.int32(batch * emb) + cols            # hoisted out of loop
        seed_mix = jnp.int32(_as_i32(seed * 0x9E3779B9 + 0x85EBCA6B))
        keep_thresh = jnp.int32(min(int(p * float(1 << 31)), (1 << 31) - 1))
        scale = jnp.float32(1.0 / (1.0 - p))

    # Static per-batch-slice loop: avoids materializing a (ts, batch*emb)
    # tiled pos tensor; each store is lane-aligned (offset b*emb) and full-lane
    # when emb % 128 == 0.
    for b in range(batch):
        sl = pl.ds(b * emb, emb)
        y = x_ref[:, sl].astype(jnp.float32) + pe
        if apply_dropout:
            h = _fmix32((base + jnp.int32(b * emb)) ^ seed_mix)
            r = h & jnp.int32(0x7FFFFFFF)                       # 31 uniform bits
            keep = r >= keep_thresh                             # drop with prob ~p
            y = jnp.where(keep, y * scale, jnp.float32(0.0))    # inverted dropout
        out_ref[:, sl] = y.astype(out_ref.dtype)


def _round_up(x: int, m: int) -> int:
    return ((x + m - 1) // m) * m


def positional_encoding(
    x: jax.Array,
    pos_table: jax.Array,
    *,
    dropout_p: float = 0.0,
    train: bool = False,
    seed: int = 0,
    x_block_bytes: int = 4 * 1024 * 1024,
    max_block_rows: int = 1024,
) -> jax.Array:
    """Equivalent of PositionalEncoding.forward.

    x: (seq, batch, emb); pos_table: (maxlen, emb), maxlen >= seq.
    Works for f32 or bf16 activations (bf16 halves HBM traffic on this
    bandwidth-bound op).
    """
    S, B, E = x.shape
    maxlen, E2 = pos_table.shape
    assert E2 == E and maxlen >= S
    if pos_table.dtype != x.dtype:
        pos_table = pos_table.astype(x.dtype)

    itemsize = jnp.dtype(x.dtype).itemsize
    # Lane-dense minor dim: flatten (batch, emb) -> width B*E.  E should be a
    # multiple of 128 for full-lane stores (correct either way).
    x2 = x.reshape(S, B * E)

    # Sublane granularity of the seq axis: 8 rows for f32, 16 for bf16.
    sub = max(8, 32 // itemsize)

    # Balanced seq tiling: VMEM-budgeted block cap, no tiny tail block, and a
    # couple of grid steps minimum so the "parallel" axis can shard across
    # v7x's two TensorCores.
    row_bytes = B * E * itemsize
    ts_cap = max(sub, min(max_block_rows,
                          (x_block_bytes // max(row_bytes, 1)) // sub * sub))
    min_steps = min(4, max(1, S // sub))
    nsteps = max(min_steps, pl.cdiv(S, ts_cap))
    ts = _round_up(pl.cdiv(S, nsteps), sub)
    nsteps = pl.cdiv(S, ts)

    # Keep the (possibly partial) last block's pos-table DMA in bounds.
    needed = nsteps * ts
    if maxlen < needed:
        pos_table = jnp.pad(pos_table, ((0, needed - maxlen), (0, 0)))

    # Real pipeline footprint: 2x double-buffered x-in + 2x out + 2x pos blocks
    # plus in-kernel f32 temporaries; raise the scoped-VMEM limit accordingly
    # (v5e default is only 16 MiB) while staying well under v7x's 64 MiB.
    x_blk = ts * B * E * itemsize
    pos_blk = ts * E * itemsize
    est = 4 * x_blk + 2 * pos_blk + 8 * ts * E * 4
    vmem_limit = int(min(48 << 20, max(32 << 20, int(est * 1.25))))

    kernel = functools.partial(
        _pos_encoding_kernel,
        batch=B, emb=E, p=float(dropout_p), train=bool(train), seed=int(seed),
    )

    out2 = pl.pallas_call(
        kernel,
        out_shape=jax.ShapeDtypeStruct((S, B * E), x.dtype),
        grid_spec=pltpu.PrefetchScalarGridSpec(
            num_scalar_prefetch=0,
            grid=(nsteps,),
            in_specs=[
                pl.BlockSpec((ts, B * E), lambda i: (i, 0)),   # x rows
                pl.BlockSpec((ts, E), lambda i: (i, 0)),       # matching pos rows
            ],
            out_specs=pl.BlockSpec((ts, B * E), lambda i: (i, 0)),
        ),
        compiler_params=pltpu.CompilerParams(
            dimension_semantics=("parallel",),
            vmem_limit_bytes=vmem_limit),
    )(x2, pos_table)

    return out2.reshape(S, B, E)


if __name__ == "__main__":
    # Small shapes consistent with the module's seq-first transformer layout.
    emb_size = 128
    batch, seq = 2, 8
    maxlen = 64
    dropout_p = 0.1

    key = jax.random.PRNGKey(0)
    x = jax.random.normal(key, (seq, batch, emb_size), dtype=jnp.float32)
    pos_table = make_sinusoidal_table(maxlen, emb_size)

    # Eval mode (dropout is identity): deterministic check against reference.
    out_eval = jax.block_until_ready(
        positional_encoding(x, pos_table, dropout_p=dropout_p, train=False))
    ref = x + pos_table[:seq][:, None, :]
    assert out_eval.shape == (seq, batch, emb_size)
    assert jnp.allclose(out_eval, ref, atol=1e-5, rtol=1e-5)

    # Train mode: every element is either exactly 0 (dropped) or ref/(1-p) (kept).
    out_train = jax.block_until_ready(
        positional_encoding(x, pos_table, dropout_p=dropout_p, train=True, seed=1234))
    scaled = ref / (1.0 - dropout_p)
    is_zero = out_train == 0.0
    is_scaled = jnp.abs(out_train - scaled) <= 1e-4
    assert bool(jnp.all(is_zero | is_scaled))
    drop_frac = float(jnp.mean(is_zero.astype(jnp.float32)))
    assert 0.0 < drop_frac < 0.4  # ~p=0.1 expected; loose bound to avoid flakiness

    print("KERNEL_OK")
</pallas_src>

<mosaic_0001>
module attributes {stable_mosaic.version = 11 : i64} {
  func.func @_pos_encoding_kernel(%arg0: i32, %arg1: memref<8x256xf32, #tpu.memory_space<vmem>>, %arg2: memref<8x128xf32, #tpu.memory_space<vmem>>, %arg3: memref<8x256xf32, #tpu.memory_space<vmem>>) attributes {dimension_semantics = [#tpu.dimension_semantics<parallel>], iteration_bounds = array<i64: 1>, scalar_prefetch = 0 : i64, scratch_operands = 0 : i64, tpu.core_type = #tpu.core_type<tc>, window_params = [{transform_indices = @transform_0, window_bounds = array<i64: 8, 256>}, {transform_indices = @transform_1, window_bounds = array<i64: 8, 128>}, {transform_indices = @transform_2, window_bounds = array<i64: 8, 256>}]} {
    %c0 = arith.constant 0 : index
    %c0_0 = arith.constant 0 : index
    %0 = vector.load %arg2[%c0, %c0_0] : memref<8x128xf32, #tpu.memory_space<vmem>>, vector<8x128xf32>
    %c0_1 = arith.constant 0 : index
    %c0_2 = arith.constant 0 : index
    %1 = vector.load %arg1[%c0_1, %c0_2] : memref<8x256xf32, #tpu.memory_space<vmem>>, vector<8x128xf32>
    %2 = arith.addf %1, %0 : vector<8x128xf32>
    %c0_3 = arith.constant 0 : index
    %c0_4 = arith.constant 0 : index
    %3 = vector.load %arg3[%c0_3, %c0_4] : memref<8x256xf32, #tpu.memory_space<vmem>>, vector<8x128xf32>
    tpu.vector_store %arg3[%c0_3, %c0_4], %2 {strides = array<i32>} : memref<8x256xf32, #tpu.memory_space<vmem>>, vector<8x128xf32>,
    %c0_5 = arith.constant 0 : index
    %c128 = arith.constant 128 : index
    %4 = vector.load %arg1[%c0_5, %c128] : memref<8x256xf32, #tpu.memory_space<vmem>>, vector<8x128xf32>
    %5 = arith.addf %4, %0 : vector<8x128xf32>
    %c0_6 = arith.constant 0 : index
    %c128_7 = arith.constant 128 : index
    %6 = vector.load %arg3[%c0_6, %c128_7] : memref<8x256xf32, #tpu.memory_space<vmem>>, vector<8x128xf32>
    tpu.vector_store %arg3[%c0_6, %c128_7], %5 {strides = array<i32>} : memref<8x256xf32, #tpu.memory_space<vmem>>, vector<8x128xf32>,
    return
  }
  func.func @transform_0(%arg0: i32) -> (i32, i32) {
    %c0_i32 = arith.constant 0 : i32
    %c0_i32_0 = arith.constant 0 : i32
    return %arg0, %c0_i32 : i32, i32
  }
  func.func @transform_1(%arg0: i32) -> (i32, i32) {
    %c0_i32 = arith.constant 0 : i32
    %c0_i32_0 = arith.constant 0 : i32
    return %arg0, %c0_i32 : i32, i32
  }
  func.func @transform_2(%arg0: i32) -> (i32, i32) {
    %c0_i32 = arith.constant 0 : i32
    %c0_i32_0 = arith.constant 0 : i32
    return %arg0, %c0_i32 : i32, i32
  }
}

</mosaic_0001>

<llo_original>
// kernel: tpu_custom_call.1
$region0: #{tpu_custom_call.1}
  #allocation0 [shape = 'u32[]', space=smem, size = 0x4, offset = 0x4, fixed_abs, tag = 'smem constant byte address 0x4 - core index']
  #allocation1 [shape = 'u32[72,128]{1,0:T(1,128)}', space=vmem, size = 0x9000, scoped, tag = 'internal scratch']
  %s0 = inlined_call_operand.hbm [shape: f32[8,256], index: 0, kind: input, shape index: {}]
  %s1 = inlined_call_operand.hbm [shape: f32[64,128], index: 1, kind: input, shape index: {}]
  %s2 = inlined_call_operand.hbm [shape: f32[8,256], index: 2, kind: output, shape index: {}]
  %s3 = sld [smem:[#allocation0]]
  $region26: #{tpu_custom_call.1} parent=0
    _
  %s5 = ssub.s32 1, %s3
  %s6 = scalar_select 0, %s5, %s3
  $region1: #{tpu_custom_call.1} parent=0
    #allocation2 [shape = 'u8[8192]{0}', space=vmem, size = 0x2000, scoped, tag = 'input window, operand 0, single buffered']
    #allocation3 [shape = 's32[1]{0}', space=sflag, size = 0x4, scoped, tag = 'scoped memory for tpu_custom_call.1']
    #allocation4 [shape = 's32[1]{0}', space=sflag, size = 0x4, scoped, tag = 'scoped memory for tpu_custom_call.1']
    #allocation5 [shape = 'u8[4096]{0}', space=vmem, size = 0x1000, scoped, tag = 'input window, operand 1, single buffered']
    #allocation6 [shape = 's32[1]{0}', space=sflag, size = 0x4, scoped, tag = 'scoped memory for tpu_custom_call.1']
    #allocation7 [shape = 'u8[8192]{0}', space=vmem, size = 0x2000, scoped, tag = 'output window, operand 0, single buffered']
    %7 = vsyncpa [#allocation3], 0
    %8 = vsyncpa [#allocation6], 0
    %9 = vsyncpa [#allocation4], 0
    // Predicated region
    $region2: #{tpu_custom_call.1} parent=1 // pred_check
      _
    $region3: #{tpu_custom_call.1} parent=1 // pred_check_branch
      %11 = sbr.rel (0) target = $region5
    $region4: #{tpu_custom_call.1} parent=1 // pred_region
      %13 = vsyncadd [#allocation3], 0
      %s15 = sshll.u32 %s0, 4
      %s16 = int_to_ptr.hbm [resolvable:$true] %s15
      %s17 = sshll.u32 [#allocation2], 4
      %s18 = int_to_ptr.vmem [resolvable:$true] %s17
      %20 = dma.hbm_to_vmem [thread:$0]  %s16, 256, %s18, [#allocation3]
    $region5: #{tpu_custom_call.1} parent=1 // pred_fallthru
      _
    // Predicated region
    $region6: #{tpu_custom_call.1} parent=1 // pred_check
      _
    $region7: #{tpu_custom_call.1} parent=1 // pred_check_branch
      %22 = sbr.rel (0) target = $region9
    $region8: #{tpu_custom_call.1} parent=1 // pred_region
      %24 = vsyncadd [#allocation6], 0
      %s26 = sshll.u32 %s1, 4
      %s27 = int_to_ptr.hbm [resolvable:$true] %s26
      %s28 = sshll.u32 [#allocation5], 4
      %s29 = int_to_ptr.vmem [resolvable:$true] %s28
      %31 = dma.hbm_to_vmem [thread:$0]  %s27, 128, %s29, [#allocation6]
    $region9: #{tpu_custom_call.1} parent=1 // pred_fallthru
      _
    // Predicated region
    $region10: #{tpu_custom_call.1} parent=1 // pred_check
      _
    $region11: #{tpu_custom_call.1} parent=1 // pred_check_branch
      %33 = sbr.rel (0) target = $region13
    $region12: #{tpu_custom_call.1} parent=1 // pred_region
      %35 = dma.done [#allocation3], 256
    $region13: #{tpu_custom_call.1} parent=1 // pred_fallthru
      _
    // Predicated region
    $region14: #{tpu_custom_call.1} parent=1 // pred_check
      _
    $region15: #{tpu_custom_call.1} parent=1 // pred_check_branch
      %37 = sbr.rel (0) target = $region17
    $region16: #{tpu_custom_call.1} parent=1 // pred_region
      %39 = dma.done [#allocation6], 128
    $region17: #{tpu_custom_call.1} parent=1 // pred_fallthru
      _
    %v40 = vld [vmem:[#allocation5] sm:$0xff]
    %v41 = vld [vmem:[#allocation2] sm:$0xff]
    %v42 = vadd.f32 %v41, %v40
    %43 = vst [vmem:[#allocation7] sm:$0xff] %v42
    %v44 = vld [vmem:[#allocation2 + $0x8] sm:$0xff]
    %v45 = vadd.f32 %v44, %v40
    %46 = vst [vmem:[#allocation7 + $0x8] sm:$0xff] %v45
    // Predicated region
    $region18: #{tpu_custom_call.1} parent=1 // pred_check
      _
    $region19: #{tpu_custom_call.1} parent=1 // pred_check_branch
      %48 = sbr.rel (0) target = $region21
    $region20: #{tpu_custom_call.1} parent=1 // pred_region
      %50 = vsyncadd [#allocation4], 0
      %s52 = sshll.u32 [#allocation7], 4
      %s53 = int_to_ptr.vmem [resolvable:$true] %s52
      %s54 = sshll.u32 %s2, 4
      %s55 = int_to_ptr.hbm [resolvable:$true] %s54
      %57 = dma.vmem_to_hbm [thread:$0]  %s53, 256, %s55, [#allocation4]
    $region21: #{tpu_custom_call.1} parent=1 // pred_fallthru
      _
    // Predicated region
    $region22: #{tpu_custom_call.1} parent=1 // pred_check
      _
    $region23: #{tpu_custom_call.1} parent=1 // pred_check_branch
      %59 = sbr.rel (0) target = $region25
    $region24: #{tpu_custom_call.1} parent=1 // pred_region
      %61 = dma.done [#allocation4], 256
    $region25: #{tpu_custom_call.1} parent=1 // pred_fallthru
      _
    %62 = vsyncpa [#allocation3], 1
    %63 = vsyncpa [#allocation6], 1
    %64 = vsyncpa [#allocation4], 1

</llo_original>
